<compile_context>
chip_gen: v7x
topology: tpu7x:2x2x1
jax: 0.10.0
libtpu: 0.0.40
codegen_flags: <defaults>
</compile_context>

<pallas_src>
import functools
import math

import jax
import jax.numpy as jnp
from jax.experimental import pallas as pl
from jax.experimental.pallas import tpu as pltpu

LANE = 128


# ----------------------------------------------------------------------------
# Parameter / buffer setup (glue, plain JAX) -- mirrors nn.Module.__init__
# ----------------------------------------------------------------------------
def make_positional_encoding(max_len: int, d_model: int, dtype=jnp.float32):
    position = jnp.arange(max_len, dtype=jnp.float32)[:, None]            # [L, 1]
    div_term = jnp.exp(
        jnp.arange(0, d_model, 2, dtype=jnp.float32) * (-math.log(10000.0) / d_model)
    )                                                                     # [D/2]
    pe = jnp.zeros((max_len, d_model), dtype=jnp.float32)
    pe = pe.at[:, 0::2].set(jnp.sin(position * div_term))
    pe = pe.at[:, 1::2].set(jnp.cos(position * div_term))
    return pe.astype(dtype)                                               # [L, D]


# ----------------------------------------------------------------------------
# Tiling helpers (glue)
# ----------------------------------------------------------------------------
def _round_up(x: int, m: int) -> int:
    return ((x + m - 1) // m) * m


def _pick_row_tiling(nrows: int, itemsize: int, target_bytes: int = 4 << 20):
    """Return (tile_rows, n_tiles, padded_rows).

    * tile_rows is a multiple of the dtype's sublane packing (8 rows for
      4-byte, 16 for 2-byte, 32 for 1-byte) -> no masked sublane stores.
    * One (tile_rows, 128) block stays around <= target_bytes, so with
      x/out/pe double-buffered the kernel fits comfortably in v7x's 64 MiB
      VMEM while staying in the ~1-4 MiB roofline sweet spot.
    * padded_rows = tile_rows * n_tiles with waste bounded by ~align rows per
      tile (<1%); there is no unbounded fallback.
    """
    align = max(8, 32 // itemsize)
    target_rows = max(align, (target_bytes // (LANE * itemsize)) // align * align)
    nrows_al = _round_up(max(nrows, 1), align)
    n_tiles = -(-nrows_al // target_rows)                 # cdiv
    tile_rows = _round_up(-(-nrows_al // n_tiles), align)
    return tile_rows, n_tiles, tile_rows * n_tiles


# ----------------------------------------------------------------------------
# Kernels
# ----------------------------------------------------------------------------
def pe_add_kernel(x_ref, pe_ref, o_ref):
    # eval-mode forward: dropout is identity; pe (TR, LANE) broadcasts over
    # the (1, TR, LANE) batch block.
    o_ref[...] = (x_ref[...] + pe_ref[...]).astype(o_ref.dtype)


def pe_add_dropout_kernel(seed_ref, x_ref, pe_ref, o_ref, *,
                          keep_threshold: int, inv_keep: float,
                          rows_per_batch: int, tile_rows: int,
                          lane_width: int):
    # train-mode forward: add positional encoding, then inverted dropout.
    # Mask is a deterministic stateless hash of (seed, absolute element
    # index); every grid step / batch element gets an independent mask.
    # RNG stream differs from torch.nn.Dropout, but semantics (keep prob
    # 1-p, scale by 1/(1-p)) match.  Caller must vary `seed` per step.
    r = pl.program_id(0)
    b = pl.program_id(1)

    y = x_ref[...] + pe_ref[...]                       # native dtype, no upcast
    shape = y.shape                                    # (1, TR, LANE)

    # Per-element index inside this tile (vector) + a single scalar tile base
    # computed on the scalar unit.  int32 wraps for > 2^31 elements per call,
    # which merely permutes the hash stream -- statistics are unaffected.
    row_i = jax.lax.broadcasted_iota(jnp.int32, shape, 1)
    lane_i = jax.lax.broadcasted_iota(jnp.int32, shape, 2)
    base = (b * rows_per_batch + r * tile_rows) * lane_width          # scalar
    idx = row_i * lane_width + lane_i + base

    # Trimmed mixer (xorshift-mul-xorshift): ~half the VPU ops of a full
    # lowbias32 finalizer -- plenty for a dropout mask; keeps the train path
    # mem-bound on v7x / bf16.
    bits = idx.astype(jnp.uint32) + (
        seed_ref[0].astype(jnp.uint32) * jnp.uint32(0x9E3779B9))      # scalar mix
    bits = bits ^ (bits >> 16)
    bits = bits * jnp.uint32(0x7FEB352D)
    bits = bits ^ (bits >> 15)
    keep = bits >= jnp.uint32(keep_threshold)          # P(keep) = 1 - p

    scale = jnp.asarray(inv_keep, dtype=y.dtype)
    o_ref[...] = jnp.where(keep, y * scale, jnp.zeros_like(y)).astype(o_ref.dtype)


# ----------------------------------------------------------------------------
# Wrapper
# ----------------------------------------------------------------------------
def positional_encoding_forward(x, pe, *, dropout_p: float = 0.1,
                                training: bool = False, seed: int = 0,
                                fold_threshold_bytes: int = 1 << 20):
    """x: [B, S, D]; pe: [max_len, D]."""
    B, S, D = x.shape
    if training and dropout_p >= 1.0:
        return jnp.zeros_like(x)

    itemsize = jnp.dtype(x.dtype).itemsize
    L = S * D
    nrows_pb = -(-L // LANE)                  # rows per batch after lane padding
    padded_len = nrows_pb * LANE

    # Lane-dense slab: flatten the per-batch (S, D) slab and zero-pad to a
    # multiple of 128 so every store is a full-lane vst (no vst.msk).
    x_flat = x.reshape(B, L)
    pe_flat = pe[:S, :].astype(x.dtype).reshape(L)
    if padded_len != L:
        x_flat = jnp.pad(x_flat, ((0, 0), (0, padded_len - L)))
        pe_flat = jnp.pad(pe_flat, (0, padded_len - L))
    x_slab = x_flat.reshape(B, nrows_pb, LANE)
    pe_slab = pe_flat.reshape(nrows_pb, LANE)

    # Small-shape escape hatch: tiny per-batch slabs would under-fill sublanes
    # and pay per-grid-step overhead on the (row, batch) grid -- fold the
    # batch into the row axis instead (pe broadcast glue-side is negligible
    # at these sizes).  Large shapes keep the 2-D grid for pe DMA reuse.
    fold = (B > 1) and (padded_len * itemsize < fold_threshold_bytes)
    if fold:
        x_slab = x_slab.reshape(1, B * nrows_pb, LANE)
        pe_slab = jnp.broadcast_to(
            pe_slab[None], (B, nrows_pb, LANE)).reshape(B * nrows_pb, LANE)
        B_eff, nrows_eff = 1, B * nrows_pb
    else:
        B_eff, nrows_eff = B, nrows_pb

    tr, n_tiles, padded_rows = _pick_row_tiling(nrows_eff, itemsize)
    if padded_rows != nrows_eff:
        x_slab = jnp.pad(x_slab, ((0, 0), (0, padded_rows - nrows_eff), (0, 0)))
        pe_slab = jnp.pad(pe_slab, ((0, padded_rows - nrows_eff), (0, 0)))

    grid = (n_tiles, B_eff)          # batch innermost -> pe block DMA reused
    tile_bytes = tr * LANE * itemsize
    # 3 arrays (x, out, pe) x 2 buffers + headroom; tight enough for v7x 64 MiB.
    vmem_limit = int(min(100 << 20, max(16 << 20, 6 * tile_bytes + (8 << 20))))
    cparams = pltpu.CompilerParams(
        dimension_semantics=("parallel", "parallel"),    # no reduction axis
        vmem_limit_bytes=vmem_limit,
    )
    out_shape = jax.ShapeDtypeStruct((B_eff, padded_rows, LANE), x.dtype)

    if (not training) or dropout_p <= 0.0:
        out = pl.pallas_call(
            pe_add_kernel,
            out_shape=out_shape,
            grid_spec=pltpu.PrefetchScalarGridSpec(
                num_scalar_prefetch=0,
                grid=grid,
                in_specs=[
                    pl.BlockSpec((1, tr, LANE), lambda r, b: (b, r, 0)),
                    pl.BlockSpec((tr, LANE), lambda r, b: (r, 0)),
                ],
                out_specs=pl.BlockSpec((1, tr, LANE), lambda r, b: (b, r, 0)),
            ),
            compiler_params=cparams,
        )(x_slab, pe_slab)
    else:
        p = float(dropout_p)
        keep_threshold = min(int(round(p * 4294967296.0)), 4294967295)
        kernel = functools.partial(
            pe_add_dropout_kernel,
            keep_threshold=keep_threshold,
            inv_keep=1.0 / (1.0 - p),
            rows_per_batch=padded_rows,
            tile_rows=tr,
            lane_width=LANE,
        )
        seed_arr = jnp.asarray([seed], dtype=jnp.int32)
        out = pl.pallas_call(
            kernel,
            out_shape=out_shape,
            grid_spec=pltpu.PrefetchScalarGridSpec(
                num_scalar_prefetch=1,
                grid=grid,
                in_specs=[
                    pl.BlockSpec((1, tr, LANE), lambda r, b, s: (b, r, 0)),
                    pl.BlockSpec((tr, LANE), lambda r, b, s: (r, 0)),
                ],
                out_specs=pl.BlockSpec((1, tr, LANE), lambda r, b, s: (b, r, 0)),
            ),
            compiler_params=cparams,
        )(seed_arr, x_slab, pe_slab)

    out = out[:, :nrows_eff, :]
    if fold:
        out = out.reshape(B, nrows_pb, LANE)
    return out.reshape(B, padded_len)[:, :L].reshape(B, S, D)


# ----------------------------------------------------------------------------
# Main
# ----------------------------------------------------------------------------
if __name__ == "__main__":
    d_model = 32
    max_len = 500
    batch, seq_len = 2, 8
    dropout_p = 0.1

    key = jax.random.PRNGKey(0)
    x = jax.random.normal(key, (batch, seq_len, d_model), dtype=jnp.float32)
    pe = make_positional_encoding(max_len, d_model)
    ref = x + pe[None, :seq_len, :]

    # eval-mode forward (dropout = identity), small-shape folded path
    out_eval = positional_encoding_forward(x, pe, dropout_p=dropout_p,
                                           training=False)
    out_eval = jax.block_until_ready(out_eval)
    assert out_eval.shape == (batch, seq_len, d_model)
    assert jnp.allclose(out_eval, ref, atol=1e-6), "eval-mode mismatch (folded)"

    # eval-mode forward, force the 2-D (row_tiles, batch) grid path
    out_eval2 = positional_encoding_forward(x, pe, dropout_p=dropout_p,
                                            training=False,
                                            fold_threshold_bytes=0)
    out_eval2 = jax.block_until_ready(out_eval2)
    assert jnp.allclose(out_eval2, ref, atol=1e-6), "eval-mode mismatch (2-D grid)"

    # eval-mode forward with S*D not a multiple of 128 (exercises lane padding)
    x2 = jax.random.normal(jax.random.PRNGKey(1), (3, 7, 24), dtype=jnp.float32)
    pe2 = make_positional_encoding(max_len, 24)
    out2 = positional_encoding_forward(x2, pe2, dropout_p=dropout_p,
                                       training=False)
    out2 = jax.block_until_ready(out2)
    assert jnp.allclose(out2, x2 + pe2[None, :7, :], atol=1e-6), "padding mismatch"

    # train-mode forward (inverted dropout inside the kernel)
    out_train = positional_encoding_forward(x, pe, dropout_p=dropout_p,
                                            training=True, seed=123)
    out_train = jax.block_until_ready(out_train)
    scaled = ref / (1.0 - dropout_p)
    ok = jnp.isclose(out_train, scaled, atol=1e-5, rtol=1e-5) | (out_train == 0.0)
    assert bool(jnp.all(ok)), "train-mode dropout scaling mismatch"
    assert bool(jnp.any(out_train != 0.0)), "train-mode dropped everything"

    print("KERNEL_OK")
</pallas_src>

<mosaic_0001>
module attributes {stable_mosaic.version = 11 : i64} {
  func.func @pe_add_kernel(%arg0: i32, %arg1: i32, %arg2: memref<1x8x128xf32, #tpu.memory_space<vmem>>, %arg3: memref<8x128xf32, #tpu.memory_space<vmem>>, %arg4: memref<1x8x128xf32, #tpu.memory_space<vmem>>) attributes {dimension_semantics = [#tpu.dimension_semantics<parallel>, #tpu.dimension_semantics<parallel>], iteration_bounds = array<i64: 1, 1>, scalar_prefetch = 0 : i64, scratch_operands = 0 : i64, tpu.core_type = #tpu.core_type<tc>, window_params = [{transform_indices = @transform_0, window_bounds = array<i64: 1, 8, 128>}, {transform_indices = @transform_1, window_bounds = array<i64: 8, 128>}, {transform_indices = @transform_2, window_bounds = array<i64: 1, 8, 128>}]} {
    %c0 = arith.constant 0 : index
    %c0_0 = arith.constant 0 : index
    %c0_1 = arith.constant 0 : index
    %0 = vector.load %arg2[%c0, %c0_0, %c0_1] : memref<1x8x128xf32, #tpu.memory_space<vmem>>, vector<1x8x128xf32>
    %c0_2 = arith.constant 0 : index
    %c0_3 = arith.constant 0 : index
    %1 = vector.load %arg3[%c0_2, %c0_3] : memref<8x128xf32, #tpu.memory_space<vmem>>, vector<8x128xf32>
    %2 = vector.shape_cast %1 : vector<8x128xf32> to vector<1x8x128xf32>
    %3 = arith.addf %0, %2 : vector<1x8x128xf32>
    %c0_4 = arith.constant 0 : index
    %c0_5 = arith.constant 0 : index
    %c0_6 = arith.constant 0 : index
    %4 = vector.load %arg4[%c0_4, %c0_5, %c0_6] : memref<1x8x128xf32, #tpu.memory_space<vmem>>, vector<1x8x128xf32>
    tpu.vector_store %arg4[%c0_4, %c0_5, %c0_6], %3 {strides = array<i32>} : memref<1x8x128xf32, #tpu.memory_space<vmem>>, vector<1x8x128xf32>,
    return
  }
  func.func @transform_0(%arg0: i32, %arg1: i32) -> (i32, i32, i32) {
    %c0_i32 = arith.constant 0 : i32
    %c0_i32_0 = arith.constant 0 : i32
    return %arg1, %arg0, %c0_i32 : i32, i32, i32
  }
  func.func @transform_1(%arg0: i32, %arg1: i32) -> (i32, i32) {
    %c0_i32 = arith.constant 0 : i32
    %c0_i32_0 = arith.constant 0 : i32
    return %arg0, %c0_i32 : i32, i32
  }
  func.func @transform_2(%arg0: i32, %arg1: i32) -> (i32, i32, i32) {
    %c0_i32 = arith.constant 0 : i32
    %c0_i32_0 = arith.constant 0 : i32
    return %arg1, %arg0, %c0_i32 : i32, i32, i32
  }
}

</mosaic_0001>

<llo_original>
// kernel: tpu_custom_call.1
$region0: #{tpu_custom_call.1}
  #allocation0 [shape = 'u32[]', space=smem, size = 0x4, offset = 0x4, fixed_abs, tag = 'smem constant byte address 0x4 - core index']
  #allocation1 [shape = 'u32[144,128]{1,0:T(1,128)}', space=vmem, size = 0x12000, scoped, tag = 'internal scratch']
  %s0 = inlined_call_operand.hbm [shape: f32[1,8,128], index: 0, kind: input, shape index: {}]
  %s1 = inlined_call_operand.hbm [shape: f32[8,128], index: 1, kind: input, shape index: {}]
  %s2 = inlined_call_operand.hbm [shape: f32[1,8,128], index: 2, kind: output, shape index: {}]
  %s3 = sld [smem:[#allocation0]]
  $region26: #{tpu_custom_call.1} parent=0
    _
  %s5 = ssub.s32 1, %s3
  %s6 = scalar_select 0, %s5, %s3
  $region1: #{tpu_custom_call.1} parent=0
    #allocation2 [shape = 'u8[4096]{0}', space=vmem, size = 0x1000, scoped, tag = 'input window, operand 0, single buffered']
    #allocation3 [shape = 's32[1]{0}', space=sflag, size = 0x4, scoped, tag = 'scoped memory for tpu_custom_call.1']
    #allocation4 [shape = 's32[1]{0}', space=sflag, size = 0x4, scoped, tag = 'scoped memory for tpu_custom_call.1']
    #allocation5 [shape = 'u8[4096]{0}', space=vmem, size = 0x1000, scoped, tag = 'input window, operand 1, single buffered']
    #allocation6 [shape = 's32[1]{0}', space=sflag, size = 0x4, scoped, tag = 'scoped memory for tpu_custom_call.1']
    #allocation7 [shape = 'u8[4096]{0}', space=vmem, size = 0x1000, scoped, tag = 'output window, operand 0, single buffered']
    %7 = vsyncpa [#allocation3], 0
    %8 = vsyncpa [#allocation6], 0
    %9 = vsyncpa [#allocation4], 0
    // Predicated region
    $region2: #{tpu_custom_call.1} parent=1 // pred_check
      _
    $region3: #{tpu_custom_call.1} parent=1 // pred_check_branch
      %11 = sbr.rel (0) target = $region5
    $region4: #{tpu_custom_call.1} parent=1 // pred_region
      %s13 = ssub.s32 128, 128
      %14 = vsyncadd [#allocation3], %s13
      %s16 = sshll.u32 [#allocation2], 4
      %s17 = int_to_ptr.vmem [resolvable:$true] %s16
      %19 = dma.hbm_to_vmem [thread:$0]  %s0, 128, %s17, [#allocation3]
    $region5: #{tpu_custom_call.1} parent=1 // pred_fallthru
      _
    // Predicated region
    $region6: #{tpu_custom_call.1} parent=1 // pred_check
      _
    $region7: #{tpu_custom_call.1} parent=1 // pred_check_branch
      %21 = sbr.rel (0) target = $region9
    $region8: #{tpu_custom_call.1} parent=1 // pred_region
      %s23 = ssub.s32 128, 128
      %24 = vsyncadd [#allocation6], %s23
      %s26 = sshll.u32 [#allocation5], 4
      %s27 = int_to_ptr.vmem [resolvable:$true] %s26
      %29 = dma.hbm_to_vmem [thread:$0]  %s1, 128, %s27, [#allocation6]
    $region9: #{tpu_custom_call.1} parent=1 // pred_fallthru
      _
    // Predicated region
    $region10: #{tpu_custom_call.1} parent=1 // pred_check
      _
    $region11: #{tpu_custom_call.1} parent=1 // pred_check_branch
      %31 = sbr.rel (0) target = $region13
    $region12: #{tpu_custom_call.1} parent=1 // pred_region
      %32 = dma.done [#allocation3], 128
    $region13: #{tpu_custom_call.1} parent=1 // pred_fallthru
      _
    // Predicated region
    $region14: #{tpu_custom_call.1} parent=1 // pred_check
      _
    $region15: #{tpu_custom_call.1} parent=1 // pred_check_branch
      %34 = sbr.rel (0) target = $region17
    $region16: #{tpu_custom_call.1} parent=1 // pred_region
      %35 = dma.done [#allocation6], 128
    $region17: #{tpu_custom_call.1} parent=1 // pred_fallthru
      _
    %v36 = vld [vmem:[#allocation2] sm:$0xff]
    %v37 = vld [vmem:[#allocation5] sm:$0xff]
    %v38 = vadd.f32 %v36, %v37
    %39 = vst [vmem:[#allocation7] sm:$0xff] %v38
    // Predicated region
    $region18: #{tpu_custom_call.1} parent=1 // pred_check
      _
    $region19: #{tpu_custom_call.1} parent=1 // pred_check_branch
      %41 = sbr.rel (0) target = $region21
    $region20: #{tpu_custom_call.1} parent=1 // pred_region
      %s43 = ssub.s32 128, 128
      %44 = vsyncadd [#allocation4], %s43
      %s46 = sshll.u32 [#allocation7], 4
      %s47 = int_to_ptr.vmem [resolvable:$true] %s46
      %49 = dma.vmem_to_hbm [thread:$0]  %s47, 128, %s2, [#allocation4]
    $region21: #{tpu_custom_call.1} parent=1 // pred_fallthru
      _
    // Predicated region
    $region22: #{tpu_custom_call.1} parent=1 // pred_check
      _
    $region23: #{tpu_custom_call.1} parent=1 // pred_check_branch
      %51 = sbr.rel (0) target = $region25
    $region24: #{tpu_custom_call.1} parent=1 // pred_region
      %52 = dma.done [#allocation4], 128
    $region25: #{tpu_custom_call.1} parent=1 // pred_fallthru
      _
    %53 = vsyncpa [#allocation3], 1
    %54 = vsyncpa [#allocation6], 1
    %55 = vsyncpa [#allocation4], 1

</llo_original>
